<compile_context>
chip_gen: v6e
topology: v6e:2x2x1
jax: 0.10.0
libtpu: 0.0.40
codegen_flags: <defaults>
</compile_context>

<pallas_src>
import jax
import jax.numpy as jnp
from jax.experimental import pallas as pl
from jax.experimental.pallas import tpu as pltpu

B = 8          # batch
F = 128        # feature dim (CrossModalAttention feature_dim=128)
EPS = 1e-5


def model_kernel(mri_ref, snp_ref, prot_ref, p_ref, w_ref,
                 o_mri, o_snp, o_prot,
                 o_ams, o_amp, o_asp,
                 o_wms, o_wmp, o_wsp):
    # mri_ref/snp_ref/prot_ref : (B, F)
    # p_ref : (8, F)  rows 0-2 gamma, rows 3-5 beta, row 6 fc bias, row 7 pad
    # w_ref : (2F, F) shared_fc.weight.T = [w1; w2]
    bias = p_ref[6:7, :]                                   # (1, F)

    # ---- BatchNorm1d (training-mode batch stats), gamma folded into scale ----
    def bn(x, row):
        gamma = p_ref[row:row + 1, :]                      # (1, F)
        beta = p_ref[row + 3:row + 4, :]                   # (1, F)
        mean = jnp.mean(x, axis=0, keepdims=True)          # (1, F)
        diff = x - mean
        var = jnp.mean(diff * diff, axis=0, keepdims=True)
        scale = jax.lax.rsqrt(var + EPS) * gamma           # (1, F) broadcast-width mul
        return diff * scale + beta

    mri = bn(mri_ref[...], 0)                              # (B, F)
    snp = bn(snp_ref[...], 1)
    prot = bn(prot_ref[...], 2)

    o_mri[...] = mri
    o_snp[...] = snp
    o_prot[...] = prot

    # ---- CrossModalAttention via split-weight accumulation (no lane concat) ----
    w1 = w_ref[0:F, :]                                     # (F, F), tile-aligned slice
    w2 = w_ref[F:2 * F, :]                                 # (F, F)

    p_m1 = jnp.dot(mri, w1, preferred_element_type=jnp.float32)   # shared: ms, mp
    p_s1 = jnp.dot(snp, w1, preferred_element_type=jnp.float32)   # sp
    p_s2 = jnp.dot(snp, w2, preferred_element_type=jnp.float32)   # ms
    p_p2 = jnp.dot(prot, w2, preferred_element_type=jnp.float32)  # shared: mp, sp

    def attn(logits, x2, o_att, o_w):
        m = jnp.max(logits, axis=-1, keepdims=True)
        e = jnp.exp(logits - m)
        denom = jnp.sum(e, axis=-1, keepdims=True)
        w = e * pl.reciprocal(denom, approx=False)         # exact: keep 1e-4 parity
        o_w[...] = w
        o_att[...] = w * x2

    attn(p_m1 + p_s2 + bias, snp, o_ams, o_wms)
    attn(p_m1 + p_p2 + bias, prot, o_amp, o_wmp)
    attn(p_s1 + p_p2 + bias, prot, o_asp, o_wsp)


_VMEM = pl.BlockSpec(memory_space=pltpu.MemorySpace.VMEM)
_OUT_KEYS = ("mri_embedding", "snp_output", "protein_output",
             "attended_ms", "attended_mp", "attended_sp",
             "attn_weights_ms", "attn_weights_mp", "attn_weights_sp")

_forward_call = pl.pallas_call(
    model_kernel,
    out_shape=tuple(jax.ShapeDtypeStruct((B, F), jnp.float32) for _ in range(9)),
    in_specs=[_VMEM] * 5,
    out_specs=tuple([_VMEM] * 9),
)


def pack_params(params):
    """One-time (init-path) packing: (8, F) param tile + (2F, F) weight."""
    p = jnp.concatenate(
        [params["g_mri"], params["g_snp"], params["g_prot"],
         params["b_mri"], params["b_snp"], params["b_prot"],
         params["bias"], jnp.zeros((1, F), jnp.float32)], axis=0)   # (8, F)
    return p, params["w"]


def model_all_forward(mri, snp, prot, p_packed, w):
    outs = _forward_call(mri, snp, prot, p_packed, w)
    return dict(zip(_OUT_KEYS, outs))


def reference_forward(mri, snp, prot, params):
    def bn(x, g, b):
        mean = jnp.mean(x, axis=0, keepdims=True)
        var = jnp.mean((x - mean) ** 2, axis=0, keepdims=True)
        return (x - mean) / jnp.sqrt(var + EPS) * g + b

    m = bn(mri, params["g_mri"], params["b_mri"])
    s = bn(snp, params["g_snp"], params["b_snp"])
    p = bn(prot, params["g_prot"], params["b_prot"])

    w1 = params["w"][:F]
    w2 = params["w"][F:]

    def attn(x1, x2):
        logits = x1 @ w1 + x2 @ w2 + params["bias"]
        w = jax.nn.softmax(logits, axis=-1)
        return w * x2, w

    ams, wms = attn(m, s)
    amp, wmp = attn(m, p)
    asp, wsp = attn(s, p)
    return {"mri_embedding": m, "snp_output": s, "protein_output": p,
            "attended_ms": ams, "attended_mp": amp, "attended_sp": asp,
            "attn_weights_ms": wms, "attn_weights_mp": wmp,
            "attn_weights_sp": wsp}


if __name__ == "__main__":
    key = jax.random.PRNGKey(0)
    k = jax.random.split(key, 8)

    mri = jax.random.normal(k[0], (B, F), jnp.float32)
    snp = jax.random.normal(k[1], (B, F), jnp.float32)
    prot = jax.random.normal(k[2], (B, F), jnp.float32)

    # shared_fc: Linear(256, 128). Store W^T as a single (256, 128) matrix.
    bound = 1.0 / (2 * F) ** 0.5
    w_t = jax.random.uniform(k[3], (2 * F, F), jnp.float32, -bound, bound)
    bias = jax.random.uniform(k[4], (1, F), jnp.float32, -bound, bound)

    # BatchNorm affine params: gamma=1, beta=0 (PyTorch init), kept 2D.
    ones = jnp.ones((1, F), jnp.float32)
    zeros = jnp.zeros((1, F), jnp.float32)

    params = {
        "g_mri": ones, "b_mri": zeros,
        "g_snp": ones, "b_snp": zeros,
        "g_prot": ones, "b_prot": zeros,
        "w": w_t, "bias": bias,
    }

    # Init-time packing (not on the per-step path).
    p_packed, w = pack_params(params)
    p_packed = jax.block_until_ready(p_packed)

    out = model_all_forward(mri, snp, prot, p_packed, w)
    jax.block_until_ready(out)

    ref = reference_forward(mri, snp, prot, params)
    for name in _OUT_KEYS:
        assert jnp.allclose(out[name], ref[name], atol=1e-4, rtol=1e-4), name

    print("KERNEL_OK")
</pallas_src>

<mosaic_0001>
module attributes {stable_mosaic.version = 11 : i64} {
  func.func @model_kernel(%arg0: memref<8x128xf32, #tpu.memory_space<vmem>>, %arg1: memref<8x128xf32, #tpu.memory_space<vmem>>, %arg2: memref<8x128xf32, #tpu.memory_space<vmem>>, %arg3: memref<8x128xf32, #tpu.memory_space<vmem>>, %arg4: memref<256x128xf32, #tpu.memory_space<vmem>>, %arg5: memref<8x128xf32, #tpu.memory_space<vmem>>, %arg6: memref<8x128xf32, #tpu.memory_space<vmem>>, %arg7: memref<8x128xf32, #tpu.memory_space<vmem>>, %arg8: memref<8x128xf32, #tpu.memory_space<vmem>>, %arg9: memref<8x128xf32, #tpu.memory_space<vmem>>, %arg10: memref<8x128xf32, #tpu.memory_space<vmem>>, %arg11: memref<8x128xf32, #tpu.memory_space<vmem>>, %arg12: memref<8x128xf32, #tpu.memory_space<vmem>>, %arg13: memref<8x128xf32, #tpu.memory_space<vmem>>) attributes {dimension_semantics = [], scalar_prefetch = 0 : i64, scratch_operands = 0 : i64, tpu.core_type = #tpu.core_type<tc>} {
    %c6 = arith.constant 6 : index
    %c0 = arith.constant 0 : index
    %0 = vector.load %arg3[%c6, %c0] : memref<8x128xf32, #tpu.memory_space<vmem>>, vector<1x128xf32>
    %c0_0 = arith.constant 0 : index
    %c0_1 = arith.constant 0 : index
    %1 = vector.load %arg0[%c0_0, %c0_1] : memref<8x128xf32, #tpu.memory_space<vmem>>, vector<8x128xf32>
    %c0_2 = arith.constant 0 : index
    %c0_3 = arith.constant 0 : index
    %2 = vector.load %arg3[%c0_2, %c0_3] : memref<8x128xf32, #tpu.memory_space<vmem>>, vector<1x128xf32>
    %c3 = arith.constant 3 : index
    %c0_4 = arith.constant 0 : index
    %3 = vector.load %arg3[%c3, %c0_4] : memref<8x128xf32, #tpu.memory_space<vmem>>, vector<1x128xf32>
    %cst = arith.constant dense<0.000000e+00> : vector<128xf32>
    %4 = vector.multi_reduction <add>, %1, %cst [0] : vector<8x128xf32> to vector<128xf32>
    %5 = vector.shape_cast %4 : vector<128xf32> to vector<1x128xf32>
    %cst_5 = arith.constant 8.000000e+00 : f32
    %6 = vector.broadcast %cst_5 : f32 to vector<1x128xf32>
    %7 = arith.divf %5, %6 : vector<1x128xf32>
    %8 = vector.broadcast %7 : vector<1x128xf32> to vector<8x128xf32>
    %9 = arith.subf %1, %8 : vector<8x128xf32>
    %10 = arith.mulf %9, %9 : vector<8x128xf32>
    %cst_6 = arith.constant dense<0.000000e+00> : vector<128xf32>
    %11 = vector.multi_reduction <add>, %10, %cst_6 [0] : vector<8x128xf32> to vector<128xf32>
    %12 = vector.shape_cast %11 : vector<128xf32> to vector<1x128xf32>
    %cst_7 = arith.constant 8.000000e+00 : f32
    %13 = vector.broadcast %cst_7 : f32 to vector<1x128xf32>
    %14 = arith.divf %12, %13 : vector<1x128xf32>
    %cst_8 = arith.constant 9.99999974E-6 : f32
    %15 = vector.broadcast %cst_8 : f32 to vector<1x128xf32>
    %16 = arith.addf %14, %15 : vector<1x128xf32>
    %17 = math.rsqrt %16 : vector<1x128xf32>
    %18 = arith.mulf %17, %2 : vector<1x128xf32>
    %19 = vector.broadcast %18 : vector<1x128xf32> to vector<8x128xf32>
    %20 = arith.mulf %9, %19 : vector<8x128xf32>
    %21 = vector.broadcast %3 : vector<1x128xf32> to vector<8x128xf32>
    %22 = arith.addf %20, %21 : vector<8x128xf32>
    %c0_9 = arith.constant 0 : index
    %c0_10 = arith.constant 0 : index
    %23 = vector.load %arg1[%c0_9, %c0_10] : memref<8x128xf32, #tpu.memory_space<vmem>>, vector<8x128xf32>
    %c1 = arith.constant 1 : index
    %c0_11 = arith.constant 0 : index
    %24 = vector.load %arg3[%c1, %c0_11] : memref<8x128xf32, #tpu.memory_space<vmem>>, vector<1x128xf32>
    %c4 = arith.constant 4 : index
    %c0_12 = arith.constant 0 : index
    %25 = vector.load %arg3[%c4, %c0_12] : memref<8x128xf32, #tpu.memory_space<vmem>>, vector<1x128xf32>
    %cst_13 = arith.constant dense<0.000000e+00> : vector<128xf32>
    %26 = vector.multi_reduction <add>, %23, %cst_13 [0] : vector<8x128xf32> to vector<128xf32>
    %27 = vector.shape_cast %26 : vector<128xf32> to vector<1x128xf32>
    %cst_14 = arith.constant 8.000000e+00 : f32
    %28 = vector.broadcast %cst_14 : f32 to vector<1x128xf32>
    %29 = arith.divf %27, %28 : vector<1x128xf32>
    %30 = vector.broadcast %29 : vector<1x128xf32> to vector<8x128xf32>
    %31 = arith.subf %23, %30 : vector<8x128xf32>
    %32 = arith.mulf %31, %31 : vector<8x128xf32>
    %cst_15 = arith.constant dense<0.000000e+00> : vector<128xf32>
    %33 = vector.multi_reduction <add>, %32, %cst_15 [0] : vector<8x128xf32> to vector<128xf32>
    %34 = vector.shape_cast %33 : vector<128xf32> to vector<1x128xf32>
    %cst_16 = arith.constant 8.000000e+00 : f32
    %35 = vector.broadcast %cst_16 : f32 to vector<1x128xf32>
    %36 = arith.divf %34, %35 : vector<1x128xf32>
    %cst_17 = arith.constant 9.99999974E-6 : f32
    %37 = vector.broadcast %cst_17 : f32 to vector<1x128xf32>
    %38 = arith.addf %36, %37 : vector<1x128xf32>
    %39 = math.rsqrt %38 : vector<1x128xf32>
    %40 = arith.mulf %39, %24 : vector<1x128xf32>
    %41 = vector.broadcast %40 : vector<1x128xf32> to vector<8x128xf32>
    %42 = arith.mulf %31, %41 : vector<8x128xf32>
    %43 = vector.broadcast %25 : vector<1x128xf32> to vector<8x128xf32>
    %44 = arith.addf %42, %43 : vector<8x128xf32>
    %c0_18 = arith.constant 0 : index
    %c0_19 = arith.constant 0 : index
    %45 = vector.load %arg2[%c0_18, %c0_19] : memref<8x128xf32, #tpu.memory_space<vmem>>, vector<8x128xf32>
    %c2 = arith.constant 2 : index
    %c0_20 = arith.constant 0 : index
    %46 = vector.load %arg3[%c2, %c0_20] : memref<8x128xf32, #tpu.memory_space<vmem>>, vector<1x128xf32>
    %c5 = arith.constant 5 : index
    %c0_21 = arith.constant 0 : index
    %47 = vector.load %arg3[%c5, %c0_21] : memref<8x128xf32, #tpu.memory_space<vmem>>, vector<1x128xf32>
    %cst_22 = arith.constant dense<0.000000e+00> : vector<128xf32>
    %48 = vector.multi_reduction <add>, %45, %cst_22 [0] : vector<8x128xf32> to vector<128xf32>
    %49 = vector.shape_cast %48 : vector<128xf32> to vector<1x128xf32>
    %cst_23 = arith.constant 8.000000e+00 : f32
    %50 = vector.broadcast %cst_23 : f32 to vector<1x128xf32>
    %51 = arith.divf %49, %50 : vector<1x128xf32>
    %52 = vector.broadcast %51 : vector<1x128xf32> to vector<8x128xf32>
    %53 = arith.subf %45, %52 : vector<8x128xf32>
    %54 = arith.mulf %53, %53 : vector<8x128xf32>
    %cst_24 = arith.constant dense<0.000000e+00> : vector<128xf32>
    %55 = vector.multi_reduction <add>, %54, %cst_24 [0] : vector<8x128xf32> to vector<128xf32>
    %56 = vector.shape_cast %55 : vector<128xf32> to vector<1x128xf32>
    %cst_25 = arith.constant 8.000000e+00 : f32
    %57 = vector.broadcast %cst_25 : f32 to vector<1x128xf32>
    %58 = arith.divf %56, %57 : vector<1x128xf32>
    %cst_26 = arith.constant 9.99999974E-6 : f32
    %59 = vector.broadcast %cst_26 : f32 to vector<1x128xf32>
    %60 = arith.addf %58, %59 : vector<1x128xf32>
    %61 = math.rsqrt %60 : vector<1x128xf32>
    %62 = arith.mulf %61, %46 : vector<1x128xf32>
    %63 = vector.broadcast %62 : vector<1x128xf32> to vector<8x128xf32>
    %64 = arith.mulf %53, %63 : vector<8x128xf32>
    %65 = vector.broadcast %47 : vector<1x128xf32> to vector<8x128xf32>
    %66 = arith.addf %64, %65 : vector<8x128xf32>
    %c0_27 = arith.constant 0 : index
    %c0_28 = arith.constant 0 : index
    %67 = vector.load %arg5[%c0_27, %c0_28] : memref<8x128xf32, #tpu.memory_space<vmem>>, vector<8x128xf32>
    tpu.vector_store %arg5[%c0_27, %c0_28], %22 {strides = array<i32>} : memref<8x128xf32, #tpu.memory_space<vmem>>, vector<8x128xf32>,
    %c0_29 = arith.constant 0 : index
    %c0_30 = arith.constant 0 : index
    %68 = vector.load %arg6[%c0_29, %c0_30] : memref<8x128xf32, #tpu.memory_space<vmem>>, vector<8x128xf32>
    tpu.vector_store %arg6[%c0_29, %c0_30], %44 {strides = array<i32>} : memref<8x128xf32, #tpu.memory_space<vmem>>, vector<8x128xf32>,
    %c0_31 = arith.constant 0 : index
    %c0_32 = arith.constant 0 : index
    %69 = vector.load %arg7[%c0_31, %c0_32] : memref<8x128xf32, #tpu.memory_space<vmem>>, vector<8x128xf32>
    tpu.vector_store %arg7[%c0_31, %c0_32], %66 {strides = array<i32>} : memref<8x128xf32, #tpu.memory_space<vmem>>, vector<8x128xf32>,
    %c0_33 = arith.constant 0 : index
    %c0_34 = arith.constant 0 : index
    %70 = vector.load %arg4[%c0_33, %c0_34] : memref<256x128xf32, #tpu.memory_space<vmem>>, vector<128x128xf32>
    %c128 = arith.constant 128 : index
    %c0_35 = arith.constant 0 : index
    %71 = vector.load %arg4[%c128, %c0_35] : memref<256x128xf32, #tpu.memory_space<vmem>>, vector<128x128xf32>
    %cst_36 = arith.constant dense<0.000000e+00> : vector<8x128xf32>
    %72 = tpu.matmul %22, %70, %cst_36 {dimension_numbers = #tpu.dot_dimension_numbers<[1], [0], [0], [1], [0, 0, 1, 1], [], []>} : vector<8x128xf32>, vector<128x128xf32>, vector<8x128xf32> -> vector<8x128xf32>
    %cst_37 = arith.constant dense<0.000000e+00> : vector<8x128xf32>
    %73 = tpu.matmul %44, %70, %cst_37 {dimension_numbers = #tpu.dot_dimension_numbers<[1], [0], [0], [1], [0, 0, 1, 1], [], []>} : vector<8x128xf32>, vector<128x128xf32>, vector<8x128xf32> -> vector<8x128xf32>
    %cst_38 = arith.constant dense<0.000000e+00> : vector<8x128xf32>
    %74 = tpu.matmul %44, %71, %cst_38 {dimension_numbers = #tpu.dot_dimension_numbers<[1], [0], [0], [1], [0, 0, 1, 1], [], []>} : vector<8x128xf32>, vector<128x128xf32>, vector<8x128xf32> -> vector<8x128xf32>
    %cst_39 = arith.constant dense<0.000000e+00> : vector<8x128xf32>
    %75 = tpu.matmul %66, %71, %cst_39 {dimension_numbers = #tpu.dot_dimension_numbers<[1], [0], [0], [1], [0, 0, 1, 1], [], []>} : vector<8x128xf32>, vector<128x128xf32>, vector<8x128xf32> -> vector<8x128xf32>
    %76 = arith.addf %72, %74 : vector<8x128xf32>
    %77 = vector.broadcast %0 : vector<1x128xf32> to vector<8x128xf32>
    %78 = arith.addf %76, %77 : vector<8x128xf32>
    %cst_40 = arith.constant dense<0xFF800000> : vector<8xf32>
    %79 = vector.multi_reduction <maximumf>, %78, %cst_40 [1] : vector<8x128xf32> to vector<8xf32>
    %80 = vector.shape_cast %79 : vector<8xf32> to vector<8x1xf32>
    %81 = vector.broadcast %80 : vector<8x1xf32> to vector<8x128xf32>
    %82 = arith.subf %78, %81 : vector<8x128xf32>
    %83 = math.exp %82 : vector<8x128xf32>
    %cst_41 = arith.constant dense<0.000000e+00> : vector<8xf32>
    %84 = vector.multi_reduction <add>, %83, %cst_41 [1] : vector<8x128xf32> to vector<8xf32>
    %85 = vector.shape_cast %84 : vector<8xf32> to vector<8x1xf32>
    %86 = tpu.reciprocal %85 : vector<8x1xf32> -> vector<8x1xf32>
    %87 = vector.broadcast %86 : vector<8x1xf32> to vector<8x128xf32>
    %88 = arith.mulf %83, %87 : vector<8x128xf32>
    %c0_42 = arith.constant 0 : index
    %c0_43 = arith.constant 0 : index
    %89 = vector.load %arg11[%c0_42, %c0_43] : memref<8x128xf32, #tpu.memory_space<vmem>>, vector<8x128xf32>
    tpu.vector_store %arg11[%c0_42, %c0_43], %88 {strides = array<i32>} : memref<8x128xf32, #tpu.memory_space<vmem>>, vector<8x128xf32>,
    %90 = arith.mulf %88, %44 : vector<8x128xf32>
    %c0_44 = arith.constant 0 : index
    %c0_45 = arith.constant 0 : index
    %91 = vector.load %arg8[%c0_44, %c0_45] : memref<8x128xf32, #tpu.memory_space<vmem>>, vector<8x128xf32>
    tpu.vector_store %arg8[%c0_44, %c0_45], %90 {strides = array<i32>} : memref<8x128xf32, #tpu.memory_space<vmem>>, vector<8x128xf32>,
    %92 = arith.addf %72, %75 : vector<8x128xf32>
    %93 = vector.broadcast %0 : vector<1x128xf32> to vector<8x128xf32>
    %94 = arith.addf %92, %93 : vector<8x128xf32>
    %cst_46 = arith.constant dense<0xFF800000> : vector<8xf32>
    %95 = vector.multi_reduction <maximumf>, %94, %cst_46 [1] : vector<8x128xf32> to vector<8xf32>
    %96 = vector.shape_cast %95 : vector<8xf32> to vector<8x1xf32>
    %97 = vector.broadcast %96 : vector<8x1xf32> to vector<8x128xf32>
    %98 = arith.subf %94, %97 : vector<8x128xf32>
    %99 = math.exp %98 : vector<8x128xf32>
    %cst_47 = arith.constant dense<0.000000e+00> : vector<8xf32>
    %100 = vector.multi_reduction <add>, %99, %cst_47 [1] : vector<8x128xf32> to vector<8xf32>
    %101 = vector.shape_cast %100 : vector<8xf32> to vector<8x1xf32>
    %102 = tpu.reciprocal %101 : vector<8x1xf32> -> vector<8x1xf32>
    %103 = vector.broadcast %102 : vector<8x1xf32> to vector<8x128xf32>
    %104 = arith.mulf %99, %103 : vector<8x128xf32>
    %c0_48 = arith.constant 0 : index
    %c0_49 = arith.constant 0 : index
    %105 = vector.load %arg12[%c0_48, %c0_49] : memref<8x128xf32, #tpu.memory_space<vmem>>, vector<8x128xf32>
    tpu.vector_store %arg12[%c0_48, %c0_49], %104 {strides = array<i32>} : memref<8x128xf32, #tpu.memory_space<vmem>>, vector<8x128xf32>,
    %106 = arith.mulf %104, %66 : vector<8x128xf32>
    %c0_50 = arith.constant 0 : index
    %c0_51 = arith.constant 0 : index
    %107 = vector.load %arg9[%c0_50, %c0_51] : memref<8x128xf32, #tpu.memory_space<vmem>>, vector<8x128xf32>
    tpu.vector_store %arg9[%c0_50, %c0_51], %106 {strides = array<i32>} : memref<8x128xf32, #tpu.memory_space<vmem>>, vector<8x128xf32>,
    %108 = arith.addf %73, %75 : vector<8x128xf32>
    %109 = vector.broadcast %0 : vector<1x128xf32> to vector<8x128xf32>
    %110 = arith.addf %108, %109 : vector<8x128xf32>
    %cst_52 = arith.constant dense<0xFF800000> : vector<8xf32>
    %111 = vector.multi_reduction <maximumf>, %110, %cst_52 [1] : vector<8x128xf32> to vector<8xf32>
    %112 = vector.shape_cast %111 : vector<8xf32> to vector<8x1xf32>
    %113 = vector.broadcast %112 : vector<8x1xf32> to vector<8x128xf32>
    %114 = arith.subf %110, %113 : vector<8x128xf32>
    %115 = math.exp %114 : vector<8x128xf32>
    %cst_53 = arith.constant dense<0.000000e+00> : vector<8xf32>
    %116 = vector.multi_reduction <add>, %115, %cst_53 [1] : vector<8x128xf32> to vector<8xf32>
    %117 = vector.shape_cast %116 : vector<8xf32> to vector<8x1xf32>
    %118 = tpu.reciprocal %117 : vector<8x1xf32> -> vector<8x1xf32>
    %119 = vector.broadcast %118 : vector<8x1xf32> to vector<8x128xf32>
    %120 = arith.mulf %115, %119 : vector<8x128xf32>
    %c0_54 = arith.constant 0 : index
    %c0_55 = arith.constant 0 : index
    %121 = vector.load %arg13[%c0_54, %c0_55] : memref<8x128xf32, #tpu.memory_space<vmem>>, vector<8x128xf32>
    tpu.vector_store %arg13[%c0_54, %c0_55], %120 {strides = array<i32>} : memref<8x128xf32, #tpu.memory_space<vmem>>, vector<8x128xf32>,
    %122 = arith.mulf %120, %66 : vector<8x128xf32>
    %c0_56 = arith.constant 0 : index
    %c0_57 = arith.constant 0 : index
    %123 = vector.load %arg10[%c0_56, %c0_57] : memref<8x128xf32, #tpu.memory_space<vmem>>, vector<8x128xf32>
    tpu.vector_store %arg10[%c0_56, %c0_57], %122 {strides = array<i32>} : memref<8x128xf32, #tpu.memory_space<vmem>>, vector<8x128xf32>,
    return
  }
}

</mosaic_0001>

<llo_original>
// kernel: tpu_custom_call.1
$region0: #{tpu_custom_call.1}
  #allocation0 [shape = 'u32[]', space=smem, size = 0x4, offset = 0x4, fixed_abs, tag = 'smem constant byte address 0x4 - core index']
  #allocation1 [shape = 'u32[144,128]{1,0:T(1,128)}', space=vmem, size = 0x12000, scoped, tag = 'internal scratch']
  %s0 = inlined_call_operand.hbm [shape: f32[8,128], index: 0, kind: input, shape index: {}]
  %s1 = inlined_call_operand.hbm [shape: f32[8,128], index: 1, kind: input, shape index: {}]
  %s2 = inlined_call_operand.hbm [shape: f32[8,128], index: 2, kind: input, shape index: {}]
  %s3 = inlined_call_operand.hbm [shape: f32[8,128], index: 3, kind: input, shape index: {}]
  %s4 = inlined_call_operand.hbm [shape: f32[256,128], index: 4, kind: input, shape index: {}]
  %s5 = inlined_call_operand.hbm [shape: f32[8,128], index: 5, kind: output, shape index: {0}]
  %s6 = inlined_call_operand.hbm [shape: f32[8,128], index: 6, kind: output, shape index: {1}]
  %s7 = inlined_call_operand.hbm [shape: f32[8,128], index: 7, kind: output, shape index: {2}]
  %s8 = inlined_call_operand.hbm [shape: f32[8,128], index: 8, kind: output, shape index: {3}]
  %s9 = inlined_call_operand.hbm [shape: f32[8,128], index: 9, kind: output, shape index: {4}]
  %s10 = inlined_call_operand.hbm [shape: f32[8,128], index: 10, kind: output, shape index: {5}]
  %s11 = inlined_call_operand.hbm [shape: f32[8,128], index: 11, kind: output, shape index: {6}]
  %s12 = inlined_call_operand.hbm [shape: f32[8,128], index: 12, kind: output, shape index: {7}]
  %s13 = inlined_call_operand.hbm [shape: f32[8,128], index: 13, kind: output, shape index: {8}]
  %14 = xla_tuple %s5, %s6, %s7, %s8, %s9, %s10, %s11, %s12, %s13
  %s15 = sld [smem:[#allocation0]]
  $region114: #{tpu_custom_call.1} parent=0
    _
  %s17 = ssub.s32 1, %s15
  %s18 = scalar_select 0, %s17, %s15
  $region1: #{tpu_custom_call.1} parent=0
    #allocation2 [shape = 'u8[4096]{0}', space=vmem, size = 0x1000, scoped, tag = 'input window, operand 0, single buffered']
    #allocation3 [shape = 's32[1]{0}', space=sflag, size = 0x4, scoped, tag = 'scoped memory for tpu_custom_call.1']
    #allocation4 [shape = 's32[1]{0}', space=sflag, size = 0x4, scoped, tag = 'scoped memory for tpu_custom_call.1']
    #allocation5 [shape = 'u8[4096]{0}', space=vmem, size = 0x1000, scoped, tag = 'input window, operand 1, single buffered']
    #allocation6 [shape = 's32[1]{0}', space=sflag, size = 0x4, scoped, tag = 'scoped memory for tpu_custom_call.1']
    #allocation7 [shape = 'u8[4096]{0}', space=vmem, size = 0x1000, scoped, tag = 'input window, operand 2, single buffered']
    #allocation8 [shape = 'u8[4096]{0}', space=vmem, size = 0x1000, scoped, tag = 'input window, operand 3, single buffered']
    #allocation9 [shape = 's32[1]{0}', space=sflag, size = 0x4, scoped, tag = 'scoped memory for tpu_custom_call.1']
    #allocation10 [shape = 'u8[131072]{0}', space=vmem, size = 0x20000, scoped, tag = 'input window, operand 4, single buffered']
    #allocation11 [shape = 'u8[4096]{0}', space=vmem, size = 0x1000, scoped, tag = 'output window, operand 0, single buffered']
    #allocation12 [shape = 'u8[4096]{0}', space=vmem, size = 0x1000, scoped, tag = 'output window, operand 1, single buffered']
    #allocation13 [shape = 's32[1]{0}', space=sflag, size = 0x4, scoped, tag = 'scoped memory for tpu_custom_call.1']
    #allocation14 [shape = 'u8[4096]{0}', space=vmem, size = 0x1000, scoped, tag = 'output window, operand 2, single buffered']
    #allocation15 [shape = 'u8[4096]{0}', space=vmem, size = 0x1000, scoped, tag = 'output window, operand 3, single buffered']
    #allocation16 [shape = 's32[1]{0}', space=sflag, size = 0x4, scoped, tag = 'scoped memory for tpu_custom_call.1']
    #allocation17 [shape = 'u8[4096]{0}', space=vmem, size = 0x1000, scoped, tag = 'output window, operand 4, single buffered']
    #allocation18 [shape = 'u8[4096]{0}', space=vmem, size = 0x1000, scoped, tag = 'output window, operand 5, single buffered']
    #allocation19 [shape = 's32[1]{0}', space=sflag, size = 0x4, scoped, tag = 'scoped memory for tpu_custom_call.1']
    #allocation20 [shape = 'u8[4096]{0}', space=vmem, size = 0x1000, scoped, tag = 'output window, operand 6, single buffered']
    #allocation21 [shape = 'u8[4096]{0}', space=vmem, size = 0x1000, scoped, tag = 'output window, operand 7, single buffered']
    #allocation22 [shape = 's32[1]{0}', space=sflag, size = 0x4, scoped, tag = 'scoped memory for tpu_custom_call.1']
    #allocation23 [shape = 'u8[4096]{0}', space=vmem, size = 0x1000, scoped, tag = 'output window, operand 8, single buffered']
    %19 = vsyncpa [#allocation3], 0
    %20 = vsyncpa [#allocation6], 0
    %21 = vsyncpa [#allocation9], 0
    %22 = vsyncpa [#allocation4], 0
    %23 = vsyncpa [#allocation13], 0
    %24 = vsyncpa [#allocation16], 0
    %25 = vsyncpa [#allocation19], 0
    %26 = vsyncpa [#allocation22], 0
    // Predicated region
    $region2: #{tpu_custom_call.1} parent=1 // pred_check
      _
    $region3: #{tpu_custom_call.1} parent=1 // pred_check_branch
      %28 = sbr.rel (0) target = $region5
    $region4: #{tpu_custom_call.1} parent=1 // pred_region
      %s30 = ssub.s32 128, 128
      %31 = vsyncadd [#allocation3], %s30
      %s33 = sshll.u32 [#allocation2], 4
      %s34 = int_to_ptr.vmem [resolvable:$true] %s33
      %36 = dma.hbm_to_vmem [thread:$0]  %s0, 128, %s34, [#allocation3]
    $region5: #{tpu_custom_call.1} parent=1 // pred_fallthru
      _
    // Predicated region
    $region6: #{tpu_custom_call.1} parent=1 // pred_check
      _
    $region7: #{tpu_custom_call.1} parent=1 // pred_check_branch
      %38 = sbr.rel (0) target = $region9
    $region8: #{tpu_custom_call.1} parent=1 // pred_region
      %s40 = ssub.s32 128, 128
      %41 = vsyncadd [#allocation6], %s40
      %s43 = sshll.u32 [#allocation5], 4
      %s44 = int_to_ptr.vmem [resolvable:$true] %s43
      %46 = dma.hbm_to_vmem [thread:$0]  %s1, 128, %s44, [#allocation6]
    $region9: #{tpu_custom_call.1} parent=1 // pred_fallthru
      _
    // Predicated region
    $region10: #{tpu_custom_call.1} parent=1 // pred_check
      _
    $region11: #{tpu_custom_call.1} parent=1 // pred_check_branch
      %48 = sbr.rel (0) target = $region13
    $region12: #{tpu_custom_call.1} parent=1 // pred_region
      %s50 = ssub.s32 128, 128
      %51 = vsyncadd [#allocation6], %s50
      %s53 = sshll.u32 [#allocation7], 4
      %s54 = int_to_ptr.vmem [resolvable:$true] %s53
      %56 = dma.hbm_to_vmem [thread:$0]  %s2, 128, %s54, [#allocation6]
    $region13: #{tpu_custom_call.1} parent=1 // pred_fallthru
      _
    // Predicated region
    $region14: #{tpu_custom_call.1} parent=1 // pred_check
      _
    $region15: #{tpu_custom_call.1} parent=1 // pred_check_branch
      %58 = sbr.rel (0) target = $region17
    $region16: #{tpu_custom_call.1} parent=1 // pred_region
      %s60 = ssub.s32 128, 128
      %61 = vsyncadd [#allocation9], %s60
      %s63 = sshll.u32 [#allocation8], 4
      %s64 = int_to_ptr.vmem [resolvable:$true] %s63
      %66 = dma.hbm_to_vmem [thread:$0]  %s3, 128, %s64, [#allocation9]
    $region17: #{tpu_custom_call.1} parent=1 // pred_fallthru
      _
    // Predicated region
    $region18: #{tpu_custom_call.1} parent=1 // pred_check
      _
    $region19: #{tpu_custom_call.1} parent=1 // pred_check_branch
      %68 = sbr.rel (0) target = $region21
    $region20: #{tpu_custom_call.1} parent=1 // pred_region
      %s70 = ssub.s32 4096, 4096
      %71 = vsyncadd [#allocation9], %s70
      %s72 = sshll.u32 [#allocation10], 4
      %s73 = int_to_ptr.vmem [resolvable:$true] %s72
      %78 = dma.hbm_to_vmem [thread:$0]  %s4, 4096, %s73, [#allocation9], 128, 128, 8
    $region21: #{tpu_custom_call.1} parent=1 // pred_fallthru
      _
    // Predicated region
    $region22: #{tpu_custom_call.1} parent=1 // pred_check
      _
    $region23: #{tpu_custom_call.1} parent=1 // pred_check_branch
      %80 = sbr.rel (0) target = $region25
    $region24: #{tpu_custom_call.1} parent=1 // pred_region
      %81 = dma.done [#allocation3], 128
    $region25: #{tpu_custom_call.1} parent=1 // pred_fallthru
      _
    // Predicated region
    $region26: #{tpu_custom_call.1} parent=1 // pred_check
      _
    $region27: #{tpu_custom_call.1} parent=1 // pred_check_branch
      %83 = sbr.rel (0) target = $region29
    $region28: #{tpu_custom_call.1} parent=1 // pred_region
      %84 = dma.done [#allocation6], 128
    $region29: #{tpu_custom_call.1} parent=1 // pred_fallthru
      _
    // Predicated region
    $region30: #{tpu_custom_call.1} parent=1 // pred_check
      _
    $region31: #{tpu_custom_call.1} parent=1 // pred_check_branch
      %86 = sbr.rel (0) target = $region33
    $region32: #{tpu_custom_call.1} parent=1 // pred_region
      %87 = dma.done [#allocation6], 128
    $region33: #{tpu_custom_call.1} parent=1 // pred_fallthru
      _
    // Predicated region
    $region34: #{tpu_custom_call.1} parent=1 // pred_check
      _
    $region35: #{tpu_custom_call.1} parent=1 // pred_check_branch
      %89 = sbr.rel (0) target = $region37
    $region36: #{tpu_custom_call.1} parent=1 // pred_region
      %90 = dma.done [#allocation9], 128
    $region37: #{tpu_custom_call.1} parent=1 // pred_fallthru
      _
    // Predicated region
    $region38: #{tpu_custom_call.1} parent=1 // pred_check
      _
    $region39: #{tpu_custom_call.1} parent=1 // pred_check_branch
      %92 = sbr.rel (0) target = $region41
    $region40: #{tpu_custom_call.1} parent=1 // pred_region
      %93 = dma.done [#allocation9], 4096
    $region41: #{tpu_custom_call.1} parent=1 // pred_fallthru
      _
    %v94 = vld [vmem:[#allocation8 + $0x6] sm:$0x1]
    %v95 = vld [vmem:[#allocation2] sm:$0xff]
    %v96 = vld [vmem:[#allocation8] sm:$0x1]
    %v97 = vld [vmem:[#allocation8 + $0x3] sm:$0x1]
    %v98 = vrot.slane %v95, 4
    %v99 = vadd.f32 %v95, %v98
    %v100 = vrot.slane %v99, 2
    %v101 = vadd.f32 %v99, %v100
    %v102 = vrot.slane %v101, 1
    %v103 = vadd.f32 %v101, %v102
    %v104 = vrcp.pop 8.0
    %v105 = vmul.f32 %v103, %v104
    %v106 = vsub.f32 %v95, %v105
    %v107 = vmul.f32 %v106, %v106
    %v108 = vrot.slane %v107, 4
    %v109 = vadd.f32 %v107, %v108
    %v110 = vrot.slane %v109, 2
    %v111 = vadd.f32 %v109, %v110
    %v112 = vrot.slane %v111, 1
    %v113 = vadd.f32 %v111, %v112
    %v114 = vmul.f32 %v113, %v104
    %v115 = vadd.f32 %v114, 1e-05
    %v116 = vrsqrt.pop %v115
    %v117 = vmul.f32 %v116, %v96
    %v118 = vlaneseq
    %v119 = vshrl.u32 %v118, 7
    %v120 = vsub.s32 0, %v119
    %v121 = vrot.slane %v117, %v120
    %v122 = vmul.f32 %v106, %v121
    %v123 = vlaneseq
    %v124 = vshrl.u32 %v123, 7
    %v125 = vsub.s32 0, %v124
    %v126 = vrot.slane %v97, %v125
    %v127 = vadd.f32 %v122, %v126
    %v128 = vld [vmem:[#allocation5] sm:$0xff]
    %v129 = vld [vmem:[#allocation8 + $0x1] sm:$0x1]
    %v130 = vld [vmem:[#allocation8 + $0x4] sm:$0x1]
    %v131 = vrot.slane %v128, 4
    %v132 = vadd.f32 %v128, %v131
    %v133 = vrot.slane %v132, 2
    %v134 = vadd.f32 %v132, %v133
    %v135 = vrot.slane %v134, 1
    %v136 = vadd.f32 %v134, %v135
    %v137 = vmul.f32 %v136, %v104
    %v138 = vsub.f32 %v128, %v137
    %v139 = vmul.f32 %v138, %v138
    %v140 = vrot.slane %v139, 4
    %v141 = vadd.f32 %v139, %v140
    %v142 = vrot.slane %v141, 2
    %v143 = vadd.f32 %v141, %v142
    %v144 = vrot.slane %v143, 1
    %v145 = vadd.f32 %v143, %v144
    %v146 = vmul.f32 %v145, %v104
    %v147 = vadd.f32 %v146, 1e-05
    %v148 = vrsqrt.pop %v147
    %v149 = vmul.f32 %v148, %v129
    %v150 = vlaneseq
    %v151 = vshrl.u32 %v150, 7
    %v152 = vsub.s32 0, %v151
    %v153 = vrot.slane %v149, %v152
    %v154 = vmul.f32 %v138, %v153
    %v155 = vlaneseq
    %v156 = vshrl.u32 %v155, 7
    %v157 = vsub.s32 0, %v156
    %v158 = vrot.slane %v130, %v157
    %v159 = vadd.f32 %v154, %v158
    %v160 = vld [vmem:[#allocation7] sm:$0xff]
    %v161 = vld [vmem:[#allocation8 + $0x2] sm:$0x1]
    %v162 = vld [vmem:[#allocation8 + $0x5] sm:$0x1]
    %v163 = vrot.slane %v160, 4
    %v164 = vadd.f32 %v160, %v163
    %v165 = vrot.slane %v164, 2
    %v166 = vadd.f32 %v164, %v165
    %v167 = vrot.slane %v166, 1
    %v168 = vadd.f32 %v166, %v167
    %v169 = vmul.f32 %v168, %v104
    %v170 = vsub.f32 %v160, %v169
    %v171 = vmul.f32 %v170, %v170
    %v172 = vrot.slane %v171, 4
    %v173 = vadd.f32 %v171, %v172
    %v174 = vrot.slane %v173, 2
    %v175 = vadd.f32 %v173, %v174
    %v176 = vrot.slane %v175, 1
    %v177 = vadd.f32 %v175, %v176
    %v178 = vmul.f32 %v177, %v104
    %v179 = vadd.f32 %v178, 1e-05
    %v180 = vrsqrt.pop %v179
    %v181 = vmul.f32 %v180, %v161
    %v182 = vlaneseq
    %v183 = vshrl.u32 %v182, 7
    %v184 = vsub.s32 0, %v183
    %v185 = vrot.slane %v181, %v184
    %v186 = vmul.f32 %v170, %v185
    %v187 = vlaneseq
    %v188 = vshrl.u32 %v187, 7
    %v189 = vsub.s32 0, %v188
    %v190 = vrot.slane %v162, %v189
    %v191 = vadd.f32 %v186, %v190
    %192 = vst [vmem:[#allocation11] sm:$0xff] %v127
    %193 = vst [vmem:[#allocation12] sm:$0xff] %v159
    %194 = vst [vmem:[#allocation14] sm:$0xff] %v191
    %v195 = vld [vmem:[#allocation10] sm:$0xff]
    %v196 = vld [vmem:[#allocation10 + $0x8] sm:$0xff]
    %v197 = vld [vmem:[#allocation10 + $0x10] sm:$0xff]
    %v198 = vld [vmem:[#allocation10 + $0x18] sm:$0xff]
    %v199 = vld [vmem:[#allocation10 + $0x20] sm:$0xff]
    %v200 = vld [vmem:[#allocation10 + $0x28] sm:$0xff]
    %v201 = vld [vmem:[#allocation10 + $0x30] sm:$0xff]
    %v202 = vld [vmem:[#allocation10 + $0x38] sm:$0xff]
    %v203 = vld [vmem:[#allocation10 + $0x40] sm:$0xff]
    %v204 = vld [vmem:[#allocation10 + $0x48] sm:$0xff]
    %v205 = vld [vmem:[#allocation10 + $0x50] sm:$0xff]
    %v206 = vld [vmem:[#allocation10 + $0x58] sm:$0xff]
    %v207 = vld [vmem:[#allocation10 + $0x60] sm:$0xff]
    %v208 = vld [vmem:[#allocation10 + $0x68] sm:$0xff]
    %v209 = vld [vmem:[#allocation10 + $0x70] sm:$0xff]
    %v210 = vld [vmem:[#allocation10 + $0x78] sm:$0xff]
    %v211 = vld [vmem:[#allocation10 + $0x80] sm:$0xff]
    %v212 = vld [vmem:[#allocation10 + $0x88] sm:$0xff]
    %v213 = vld [vmem:[#allocation10 + $0x90] sm:$0xff]
    %v214 = vld [vmem:[#allocation10 + $0x98] sm:$0xff]
    %v215 = vld [vmem:[#allocation10 + $0xa0] sm:$0xff]
    %v216 = vld [vmem:[#allocation10 + $0xa8] sm:$0xff]
    %v217 = vld [vmem:[#allocation10 + $0xb0] sm:$0xff]
    %v218 = vld [vmem:[#allocation10 + $0xb8] sm:$0xff]
    %v219 = vld [vmem:[#allocation10 + $0xc0] sm:$0xff]
    %v220 = vld [vmem:[#allocation10 + $0xc8] sm:$0xff]
    %v221 = vld [vmem:[#allocation10 + $0xd0] sm:$0xff]
    %v222 = vld [vmem:[#allocation10 + $0xd8] sm:$0xff]
    %v223 = vld [vmem:[#allocation10 + $0xe0] sm:$0xff]
    %v224 = vld [vmem:[#allocation10 + $0xe8] sm:$0xff]
    %v225 = vld [vmem:[#allocation10 + $0xf0] sm:$0xff]
    %v226 = vld [vmem:[#allocation10 + $0xf8] sm:$0xff]
    %227 = vmatprep.subr.mxu0 0.0
    %228 = vmatpush1.msra.mxu0 %v210
    %229 = vmatprep.subr.mxu0 0.0
    %230 = vmatpush1.msra.mxu0 %v209
    %231 = vmatprep.subr.mxu0 0.0
    %232 = vmatpush1.msra.mxu0 %v208
    %233 = vmatprep.subr.mxu0 0.0
    %234 = vmatpush1.msra.mxu0 %v207
    %235 = vmatprep.subr.mxu0 0.0
    %236 = vmatpush1.msra.mxu0 %v206
    %237 = vmatprep.subr.mxu0 0.0
    %238 = vmatpush1.msra.mxu0 %v205
    %239 = vmatprep.subr.mxu0 0.0
    %240 = vmatpush1.msra.mxu0 %v204
    %241 = vmatprep.subr.mxu0 0.0
    %242 = vmatpush1.msra.mxu0 %v203
    %243 = vmatprep.subr.mxu0 0.0
    %244 = vmatpush1.msra.mxu0 %v202
    %245 = vmatprep.subr.mxu0 0.0
    %246 = vmatpush1.msra.mxu0 %v201
    %247 = vmatprep.subr.mxu0 0.0
    %248 = vmatpush1.msra.mxu0 %v200
    %249 = vmatprep.subr.mxu0 0.0
    %250 = vmatpush1.msra.mxu0 %v199
    %251 = vmatprep.subr.mxu0 0.0
    %252 = vmatpush1.msra.mxu0 %v198
    %253 = vmatprep.subr.mxu0 0.0
    %254 = vmatpush1.msra.mxu0 %v197
    %255 = vmatprep.subr.mxu0 0.0
    %256 = vmatpush1.msra.mxu0 %v196
    %257 = vmatprep.subr.mxu0 0.0
    %258 = vmatpush1.msra.mxu0 %v195
    %259 = vmatprep.subr.mxu0 0.0
    %260 = vmatpush2.msra.mxu0 0.0
    %261 = vmatprep.subr.mxu0 0.0
    %262 = vmatpush2.msra.mxu0 0.0
    %263 = vmatprep.subr.mxu0 0.0
    %264 = vmatpush2.msra.mxu0 0.0
    %265 = vmatprep.subr.mxu0 0.0
    %266 = vmatpush2.msra.mxu0 0.0
    %267 = vmatprep.subr.mxu0 0.0
    %268 = vmatpush2.msra.mxu0 0.0
    %269 = vmatprep.subr.mxu0 0.0
    %270 = vmatpush2.msra.mxu0 0.0
    %271 = vmatprep.subr.mxu0 0.0
    %272 = vmatpush2.msra.mxu0 0.0
    %273 = vmatprep.subr.mxu0 0.0
    %274 = vmatpush2.msra.mxu0 0.0
    %275 = vmatprep.subr.mxu0 0.0
    %276 = vmatpush2.msra.mxu0 0.0
    %277 = vmatprep.subr.mxu0 0.0
    %278 = vmatpush2.msra.mxu0 0.0
    %279 = vmatprep.subr.mxu0 0.0
    %280 = vmatpush2.msra.mxu0 0.0
    %281 = vmatprep.subr.mxu0 0.0
    %282 = vmatpush2.msra.mxu0 0.0
    %283 = vmatprep.subr.mxu0 0.0
    %284 = vmatpush2.msra.mxu0 0.0
    %285 = vmatprep.subr.mxu0 0.0
    %286 = vmatpush2.msra.mxu0 0.0
    %287 = vmatprep.subr.mxu0 0.0
    %288 = vmatpush2.msra.mxu0 0.0
    %289 = vmatprep.subr.mxu0 0.0
    %290 = vmatpush2.msra.mxu0 0.0
    %291 = vmatprep.mubr.f32.mxu0 0.0
    %292 = vmatmul.mubr.f32.gmra.mxu0 %v127
    %v293 = vpop.f32.mrf.mxu0
    %v294 = vadd.f32 0.0, %v293
    %v295 = vpop.f32.mrf.mxu0
    %296 = vdwg.mxu0
    %297 = vmatprep.subr.mxu0 0.0
    %298 = vmatpush1.msra.mxu0 %v226
    %299 = vmatprep.subr.mxu0 0.0
    %300 = vmatpush1.msra.mxu0 %v225
    %301 = vmatprep.subr.mxu0 0.0
    %302 = vmatpush1.msra.mxu0 %v224
    %303 = vmatprep.subr.mxu0 0.0
    %304 = vmatpush1.msra.mxu0 %v223
    %305 = vmatprep.subr.mxu0 0.0
    %306 = vmatpush1.msra.mxu0 %v222
    %307 = vmatprep.subr.mxu0 0.0
    %308 = vmatpush1.msra.mxu0 %v221
    %309 = vmatprep.subr.mxu0 0.0
    %310 = vmatpush1.msra.mxu0 %v220
    %311 = vmatprep.subr.mxu0 0.0
    %312 = vmatpush1.msra.mxu0 %v219
    %313 = vmatprep.subr.mxu0 0.0
    %314 = vmatpush1.msra.mxu0 %v218
    %315 = vmatprep.subr.mxu0 0.0
    %316 = vmatpush1.msra.mxu0 %v217
    %317 = vmatprep.subr.mxu0 0.0
    %318 = vmatpush1.msra.mxu0 %v216
    %319 = vmatprep.subr.mxu0 0.0
    %320 = vmatpush1.msra.mxu0 %v215
    %321 = vmatprep.subr.mxu0 0.0
    %322 = vmatpush1.msra.mxu0 %v214
    %323 = vmatprep.subr.mxu0 0.0
    %324 = vmatpush1.msra.mxu0 %v213
    %325 = vmatprep.subr.mxu0 0.0
    %326 = vmatpush1.msra.mxu0 %v212
    %327 = vmatprep.subr.mxu0 0.0
    %328 = vmatpush1.msra.mxu0 %v211
    %329 = vmatprep.subr.mxu0 0.0
    %330 = vmatpush2.msra.mxu0 0.0
    %331 = vmatprep.subr.mxu0 0.0
    %332 = vmatpush2.msra.mxu0 0.0
    %333 = vmatprep.subr.mxu0 0.0
    %334 = vmatpush2.msra.mxu0 0.0
    %335 = vmatprep.subr.mxu0 0.0
    %336 = vmatpush2.msra.mxu0 0.0
    %337 = vmatprep.subr.mxu0 0.0
    %338 = vmatpush2.msra.mxu0 0.0
    %339 = vmatprep.subr.mxu0 0.0
    %340 = vmatpush2.msra.mxu0 0.0
    %341 = vmatprep.subr.mxu0 0.0
    %342 = vmatpush2.msra.mxu0 0.0
    %343 = vmatprep.subr.mxu0 0.0
    %344 = vmatpush2.msra.mxu0 0.0
    %345 = vmatprep.subr.mxu0 0.0
    %346 = vmatpush2.msra.mxu0 0.0
    %347 = vmatprep.subr.mxu0 0.0
    %348 = vmatpush2.msra.mxu0 0.0
    %349 = vmatprep.subr.mxu0 0.0
    %350 = vmatpush2.msra.mxu0 0.0
    %351 = vmatprep.subr.mxu0 0.0
    %352 = vmatpush2.msra.mxu0 0.0
    %353 = vmatprep.subr.mxu0 0.0
    %354 = vmatpush2.msra.mxu0 0.0
    %355 = vmatprep.subr.mxu0 0.0
    %356 = vmatpush2.msra.mxu0 0.0
    %357 = vmatprep.subr.mxu0 0.0
    %358 = vmatpush2.msra.mxu0 0.0
    %359 = vmatprep.subr.mxu0 0.0
    %360 = vmatpush2.msra.mxu0 0.0
    %361 = vmatprep.mubr.f32.mxu0 0.0
    %362 = vmatmul.mubr.f32.gmra.mxu0 %v159
    %v363 = vpop.f32.mrf.mxu0
    %v364 = vadd.f32 0.0, %v363
    %v365 = vpop.f32.mrf.mxu0
    %366 = vdwg.mxu0
    %367 = vmatprep.subr.mxu0 0.0
    %368 = vmatpush1.msra.mxu0 %v226
    %369 = vmatprep.subr.mxu0 0.0
    %370 = vmatpush1.msra.mxu0 %v225
    %371 = vmatprep.subr.mxu0 0.0
    %372 = vmatpush1.msra.mxu0 %v224
    %373 = vmatprep.subr.mxu0 0.0
    %374 = vmatpush1.msra.mxu0 %v223
    %375 = vmatprep.subr.mxu0 0.0
    %376 = vmatpush1.msra.mxu0 %v222
    %377 = vmatprep.subr.mxu0 0.0
    %378 = vmatpush1.msra.mxu0 %v221
    %379 = vmatprep.subr.mxu0 0.0
    %380 = vmatpush1.msra.mxu0 %v220
    %381 = vmatprep.subr.mxu0 0.0
    %382 = vmatpush1.msra.mxu0 %v219
    %383 = vmatprep.subr.mxu0 0.0
    %384 = vmatpush1.msra.mxu0 %v218
    %385 = vmatprep.subr.mxu0 0.0
    %386 = vmatpush1.msra.mxu0 %v217
    %387 = vmatprep.subr.mxu0 0.0
    %388 = vmatpush1.msra.mxu0 %v216
    %389 = vmatprep.subr.mxu0 0.0
    %390 = vmatpush1.msra.mxu0 %v215
    %391 = vmatprep.subr.mxu0 0.0
    %392 = vmatpush1.msra.mxu0 %v214
    %393 = vmatprep.subr.mxu0 0.0
    %394 = vmatpush1.msra.mxu0 %v213
    %395 = vmatprep.subr.mxu0 0.0
    %396 = vmatpush1.msra.mxu0 %v212
    %397 = vmatprep.subr.mxu0 0.0
    %398 = vmatpush1.msra.mxu0 %v211
    %399 = vmatprep.subr.mxu0 0.0
    %400 = vmatpush2.msra.mxu0 0.0
    %401 = vmatprep.subr.mxu0 0.0
    %402 = vmatpush2.msra.mxu0 0.0
    %403 = vmatprep.subr.mxu0 0.0
    %404 = vmatpush2.msra.mxu0 0.0
    %405 = vmatprep.subr.mxu0 0.0
    %406 = vmatpush2.msra.mxu0 0.0
    %407 = vmatprep.subr.mxu0 0.0
    %408 = vmatpush2.msra.mxu0 0.0
    %409 = vmatprep.subr.mxu0 0.0
    %410 = vmatpush2.msra.mxu0 0.0
    %411 = vmatprep.subr.mxu0 0.0
    %412 = vmatpush2.msra.mxu0 0.0
    %413 = vmatprep.subr.mxu0 0.0
    %414 = vmatpush2.msra.mxu0 0.0
    %415 = vmatprep.subr.mxu0 0.0
    %416 = vmatpush2.msra.mxu0 0.0
    %417 = vmatprep.subr.mxu0 0.0
    %418 = vmatpush2.msra.mxu0 0.0
    %419 = vmatprep.subr.mxu0 0.0
    %420 = vmatpush2.msra.mxu0 0.0
    %421 = vmatprep.subr.mxu0 0.0
    %422 = vmatpush2.msra.mxu0 0.0
    %423 = vmatprep.subr.mxu0 0.0
    %424 = vmatpush2.msra.mxu0 0.0
    %425 = vmatprep.subr.mxu0 0.0
    %426 = vmatpush2.msra.mxu0 0.0
    %427 = vmatprep.subr.mxu0 0.0
    %428 = vmatpush2.msra.mxu0 0.0
    %429 = vmatprep.subr.mxu0 0.0
    %430 = vmatpush2.msra.mxu0 0.0
    %431 = vmatprep.mubr.f32.mxu0 0.0
    %432 = vmatmul.mubr.f32.gmra.mxu0 %v191
    %v433 = vpop.f32.mrf.mxu0
    %v434 = vadd.f32 0.0, %v433
    %v435 = vpop.f32.mrf.mxu0
    %436 = vdwg.mxu0
    %v437 = vadd.f32 %v294, %v364
    %v438 = vlaneseq
    %v439 = vshrl.u32 %v438, 7
    %v440 = vsub.s32 0, %v439
    %v441 = vrot.slane %v94, %v440
    %v442 = vadd.f32 %v437, %v441
    %443 = vmax.xlane.f32.xlu0 %v442
    %v444 = vpop.xlane.xlu0 %443
    %v445 = vsub.f32 %v442, %v444
    %v446 = vmul.f32 %v445, 1.442695
    %v447 = vpow.pop %v446
    %448 = vadd.xlane.f32.xlu0 %v447
    %v449 = vpop.xlane.xlu0 %448
    %v450 = vrcp.pop %v449
    %v451 = vmul.f32 %v447, %v450
    %452 = vst [vmem:[#allocation20] sm:$0xff] %v451
    %v453 = vmul.f32 %v451, %v159
    %454 = vst [vmem:[#allocation15] sm:$0xff] %v453
    %v455 = vadd.f32 %v294, %v434
    %v456 = vadd.f32 %v455, %v441
    %457 = vmax.xlane.f32.xlu0 %v456
    %v458 = vpop.xlane.xlu0 %457
    %v459 = vsub.f32 %v456, %v458
    %v460 = vmul.f32 %v459, 1.442695
    %v461 = vpow.pop %v460
    %462 = vadd.xlane.f32.xlu0 %v461
    %v463 = vpop.xlane.xlu0 %462
    %v464 = vrcp.pop %v463
    %v465 = vmul.f32 %v461, %v464
    %466 = vst [vmem:[#allocation21] sm:$0xff] %v465
    %v467 = vmul.f32 %v465, %v191
    %468 = vst [vmem:[#allocation17] sm:$0xff] %v467
    %469 = vmatprep.subr.mxu0 0.0
    %470 = vmatpush1.msra.mxu0 %v210
    %471 = vmatprep.subr.mxu0 0.0
    %472 = vmatpush1.msra.mxu0 %v209
    %473 = vmatprep.subr.mxu0 0.0
    %474 = vmatpush1.msra.mxu0 %v208
    %475 = vmatprep.subr.mxu0 0.0
    %476 = vmatpush1.msra.mxu0 %v207
    %477 = vmatprep.subr.mxu0 0.0
    %478 = vmatpush1.msra.mxu0 %v206
    %479 = vmatprep.subr.mxu0 0.0
    %480 = vmatpush1.msra.mxu0 %v205
    %481 = vmatprep.subr.mxu0 0.0
    %482 = vmatpush1.msra.mxu0 %v204
    %483 = vmatprep.subr.mxu0 0.0
    %484 = vmatpush1.msra.mxu0 %v203
    %485 = vmatprep.subr.mxu0 0.0
    %486 = vmatpush1.msra.mxu0 %v202
    %487 = vmatprep.subr.mxu0 0.0
    %488 = vmatpush1.msra.mxu0 %v201
    %489 = vmatprep.subr.mxu0 0.0
    %490 = vmatpush1.msra.mxu0 %v200
    %491 = vmatprep.subr.mxu0 0.0
    %492 = vmatpush1.msra.mxu0 %v199
    %493 = vmatprep.subr.mxu0 0.0
    %494 = vmatpush1.msra.mxu0 %v198
    %495 = vmatprep.subr.mxu0 0.0
    %496 = vmatpush1.msra.mxu0 %v197
    %497 = vmatprep.subr.mxu0 0.0
    %498 = vmatpush1.msra.mxu0 %v196
    %499 = vmatprep.subr.mxu0 0.0
    %500 = vmatpush1.msra.mxu0 %v195
    %501 = vmatprep.subr.mxu0 0.0
    %502 = vmatpush2.msra.mxu0 0.0
    %503 = vmatprep.subr.mxu0 0.0
    %504 = vmatpush2.msra.mxu0 0.0
    %505 = vmatprep.subr.mxu0 0.0
    %506 = vmatpush2.msra.mxu0 0.0
    %507 = vmatprep.subr.mxu0 0.0
    %508 = vmatpush2.msra.mxu0 0.0
    %509 = vmatprep.subr.mxu0 0.0
    %510 = vmatpush2.msra.mxu0 0.0
    %511 = vmatprep.subr.mxu0 0.0
    %512 = vmatpush2.msra.mxu0 0.0
    %513 = vmatprep.subr.mxu0 0.0
    %514 = vmatpush2.msra.mxu0 0.0
    %515 = vmatprep.subr.mxu0 0.0
    %516 = vmatpush2.msra.mxu0 0.0
    %517 = vmatprep.subr.mxu0 0.0
    %518 = vmatpush2.msra.mxu0 0.0
    %519 = vmatprep.subr.mxu0 0.0
    %520 = vmatpush2.msra.mxu0 0.0
    %521 = vmatprep.subr.mxu0 0.0
    %522 = vmatpush2.msra.mxu0 0.0
    %523 = vmatprep.subr.mxu0 0.0
    %524 = vmatpush2.msra.mxu0 0.0
    %525 = vmatprep.subr.mxu0 0.0
    %526 = vmatpush2.msra.mxu0 0.0
    %527 = vmatprep.subr.mxu0 0.0
    %528 = vmatpush2.msra.mxu0 0.0
    %529 = vmatprep.subr.mxu0 0.0
    %530 = vmatpush2.msra.mxu0 0.0
    %531 = vmatprep.subr.mxu0 0.0
    %532 = vmatpush2.msra.mxu0 0.0
    %533 = vmatprep.mubr.f32.mxu0 0.0
    %534 = vmatmul.mubr.f32.gmra.mxu0 %v159
    %v535 = vpop.f32.mrf.mxu0
    %v536 = vadd.f32 %v434, %v535
    %v537 = vpop.f32.mrf.mxu0
    %538 = vdwg.mxu0
    %v539 = vadd.f32 %v536, %v441
    %540 = vmax.xlane.f32.xlu0 %v539
    %v541 = vpop.xlane.xlu0 %540
    %v542 = vsub.f32 %v539, %v541
    %v543 = vmul.f32 %v542, 1.442695
    %v544 = vpow.pop %v543
    %545 = vadd.xlane.f32.xlu0 %v544
    %v546 = vpop.xlane.xlu0 %545
    %v547 = vrcp.pop %v546
    %v548 = vmul.f32 %v544, %v547
    %549 = vst [vmem:[#allocation23] sm:$0xff] %v548
    %v550 = vmul.f32 %v548, %v191
    %551 = vst [vmem:[#allocation18] sm:$0xff] %v550
    // Predicated region
    $region42: #{tpu_custom_call.1} parent=1 // pred_check
      _
    $region43: #{tpu_custom_call.1} parent=1 // pred_check_branch
      %553 = sbr.rel (0) target = $region45
    $region44: #{tpu_custom_call.1} parent=1 // pred_region
      %s555 = ssub.s32 128, 128
      %556 = vsyncadd [#allocation4], %s555
      %s558 = sshll.u32 [#allocation11], 4
      %s559 = int_to_ptr.vmem [resolvable:$true] %s558
      %561 = dma.vmem_to_hbm [thread:$0]  %s559, 128, %s5, [#allocation4]
    $region45: #{tpu_custom_call.1} parent=1 // pred_fallthru
      _
    // Predicated region
    $region46: #{tpu_custom_call.1} parent=1 // pred_check
      _
    $region47: #{tpu_custom_call.1} parent=1 // pred_check_branch
      %563 = sbr.rel (0) target = $region49
    $region48: #{tpu_custom_call.1} parent=1 // pred_region
      %s565 = ssub.s32 128, 128
      %566 = vsyncadd [#allocation13], %s565
      %s568 = sshll.u32 [#allocation12], 4
      %s569 = int_to_ptr.vmem [resolvable:$true] %s568
      %571 = dma.vmem_to_hbm [thread:$0]  %s569, 128, %s6, [#allocation13]
    $region49: #{tpu_custom_call.1} parent=1 // pred_fallthru
      _
    // Predicated region
    $region50: #{tpu_custom_call.1} parent=1 // pred_check
      _
    $region51: #{tpu_custom_call.1} parent=1 // pred_check_branch
      %573 = sbr.rel (0) target = $region53
    $region52: #{tpu_custom_call.1} parent=1 // pred_region
      %s575 = ssub.s32 128, 128
      %576 = vsyncadd [#allocation13], %s575
      %s578 = sshll.u32 [#allocation14], 4
      %s579 = int_to_ptr.vmem [resolvable:$true] %s578
      %581 = dma.vmem_to_hbm [thread:$0]  %s579, 128, %s7, [#allocation13]
    $region53: #{tpu_custom_call.1} parent=1 // pred_fallthru
      _
    // Predicated region
    $region54: #{tpu_custom_call.1} parent=1 // pred_check
      _
    $region55: #{tpu_custom_call.1} parent=1 // pred_check_branch
      %583 = sbr.rel (0) target = $region57
    $region56: #{tpu_custom_call.1} parent=1 // pred_region
      %s585 = ssub.s32 128, 128
      %586 = vsyncadd [#allocation16], %s585
      %s588 = sshll.u32 [#allocation15], 4
      %s589 = int_to_ptr.vmem [resolvable:$true] %s588
      %591 = dma.vmem_to_hbm [thread:$0]  %s589, 128, %s8, [#allocation16]
    $region57: #{tpu_custom_call.1} parent=1 // pred_fallthru
      _
    // Predicated region
    $region58: #{tpu_custom_call.1} parent=1 // pred_check
      _
    $region59: #{tpu_custom_call.1} parent=1 // pred_check_branch
      %593 = sbr.rel (0) target = $region61
    $region60: #{tpu_custom_call.1} parent=1 // pred_region
      %s595 = ssub.s32 128, 128
      %596 = vsyncadd [#allocation16], %s595
      %s598 = sshll.u32 [#allocation17], 4
      %s599 = int_to_ptr.vmem [resolvable:$true] %s598
      %601 = dma.vmem_to_hbm [thread:$0]  %s599, 128, %s9, [#allocation16]
    $region61: #{tpu_custom_call.1} parent=1 // pred_fallthru
      _
    // Predicated region
    $region62: #{tpu_custom_call.1} parent=1 // pred_check
      _
    $region63: #{tpu_custom_call.1} parent=1 // pred_check_branch
      %603 = sbr.rel (0) target = $region65
    $region64: #{tpu_custom_call.1} parent=1 // pred_region
      %s605 = ssub.s32 128, 128
      %606 = vsyncadd [#allocation19], %s605
      %s608 = sshll.u32 [#allocation18], 4
      %s609 = int_to_ptr.vmem [resolvable:$true] %s608
      %611 = dma.vmem_to_hbm [thread:$0]  %s609, 128, %s10, [#allocation19]
    $region65: #{tpu_custom_call.1} parent=1 // pred_fallthru
      _
    // Predicated region
    $region66: #{tpu_custom_call.1} parent=1 // pred_check
      _
    $region67: #{tpu_custom_call.1} parent=1 // pred_check_branch
      %613 = sbr.rel (0) target = $region69
    $region68: #{tpu_custom_call.1} parent=1 // pred_region
      %s615 = ssub.s32 128, 128
      %616 = vsyncadd [#allocation19], %s615
      %s618 = sshll.u32 [#allocation20], 4
      %s619 = int_to_ptr.vmem [resolvable:$true] %s618
      %621 = dma.vmem_to_hbm [thread:$0]  %s619, 128, %s11, [#allocation19]
    $region69: #{tpu_custom_call.1} parent=1 // pred_fallthru
      _
    // Predicated region
    $region70: #{tpu_custom_call.1} parent=1 // pred_check
      _
    $region71: #{tpu_custom_call.1} parent=1 // pred_check_branch
      %623 = sbr.rel (0) target = $region73
    $region72: #{tpu_custom_call.1} parent=1 // pred_region
      %s625 = ssub.s32 128, 128
      %626 = vsyncadd [#allocation22], %s625
      %s628 = sshll.u32 [#allocation21], 4
      %s629 = int_to_ptr.vmem [resolvable:$true] %s628
      %631 = dma.vmem_to_hbm [thread:$0]  %s629, 128, %s12, [#allocation22]
    $region73: #{tpu_custom_call.1} parent=1 // pred_fallthru
      _
    // Predicated region
    $region74: #{tpu_custom_call.1} parent=1 // pred_check
      _
    $region75: #{tpu_custom_call.1} parent=1 // pred_check_branch
      %633 = sbr.rel (0) target = $region77
    $region76: #{tpu_custom_call.1} parent=1 // pred_region
      %s635 = ssub.s32 128, 128
      %636 = vsyncadd [#allocation22], %s635
      %s638 = sshll.u32 [#allocation23], 4
      %s639 = int_to_ptr.vmem [resolvable:$true] %s638
      %641 = dma.vmem_to_hbm [thread:$0]  %s639, 128, %s13, [#allocation22]
    $region77: #{tpu_custom_call.1} parent=1 // pred_fallthru
      _
    // Predicated region
    $region78: #{tpu_custom_call.1} parent=1 // pred_check
      _
    $region79: #{tpu_custom_call.1} parent=1 // pred_check_branch
      %643 = sbr.rel (0) target = $region81
    $region80: #{tpu_custom_call.1} parent=1 // pred_region
      %644 = dma.done [#allocation4], 128
    $region81: #{tpu_custom_call.1} parent=1 // pred_fallthru
      _
    // Predicated region
    $region82: #{tpu_custom_call.1} parent=1 // pred_check
      _
    $region83: #{tpu_custom_call.1} parent=1 // pred_check_branch
      %646 = sbr.rel (0) target = $region85
    $region84: #{tpu_custom_call.1} parent=1 // pred_region
      %647 = dma.done [#allocation13], 128
    $region85: #{tpu_custom_call.1} parent=1 // pred_fallthru
      _
    // Predicated region
    $region86: #{tpu_custom_call.1} parent=1 // pred_check
      _
    $region87: #{tpu_custom_call.1} parent=1 // pred_check_branch
      %649 = sbr.rel (0) target = $region89
    $region88: #{tpu_custom_call.1} parent=1 // pred_region
      %650 = dma.done [#allocation13], 128
    $region89: #{tpu_custom_call.1} parent=1 // pred_fallthru
      _
    // Predicated region
    $region90: #{tpu_custom_call.1} parent=1 // pred_check
      _
    $region91: #{tpu_custom_call.1} parent=1 // pred_check_branch
      %652 = sbr.rel (0) target = $region93
    $region92: #{tpu_custom_call.1} parent=1 // pred_region
      %653 = dma.done [#allocation16], 128
    $region93: #{tpu_custom_call.1} parent=1 // pred_fallthru
      _
    // Predicated region
    $region94: #{tpu_custom_call.1} parent=1 // pred_check
      _
    $region95: #{tpu_custom_call.1} parent=1 // pred_check_branch
      %655 = sbr.rel (0) target = $region97
    $region96: #{tpu_custom_call.1} parent=1 // pred_region
      %656 = dma.done [#allocation16], 128
    $region97: #{tpu_custom_call.1} parent=1 // pred_fallthru
      _
    // Predicated region
    $region98: #{tpu_custom_call.1} parent=1 // pred_check
      _
    $region99: #{tpu_custom_call.1} parent=1 // pred_check_branch
      %658 = sbr.rel (0) target = $region101
    $region100: #{tpu_custom_call.1} parent=1 // pred_region
      %659 = dma.done [#allocation19], 128
    $region101: #{tpu_custom_call.1} parent=1 // pred_fallthru
      _
    // Predicated region
    $region102: #{tpu_custom_call.1} parent=1 // pred_check
      _
    $region103: #{tpu_custom_call.1} parent=1 // pred_check_branch
      %661 = sbr.rel (0) target = $region105
    $region104: #{tpu_custom_call.1} parent=1 // pred_region
      %662 = dma.done [#allocation19], 128
    $region105: #{tpu_custom_call.1} parent=1 // pred_fallthru
      _
    // Predicated region
    $region106: #{tpu_custom_call.1} parent=1 // pred_check
      _
    $region107: #{tpu_custom_call.1} parent=1 // pred_check_branch
      %664 = sbr.rel (0) target = $region109
    $region108: #{tpu_custom_call.1} parent=1 // pred_region
      %665 = dma.done [#allocation22], 128
    $region109: #{tpu_custom_call.1} parent=1 // pred_fallthru
      _
    // Predicated region
    $region110: #{tpu_custom_call.1} parent=1 // pred_check
      _
    $region111: #{tpu_custom_call.1} parent=1 // pred_check_branch
      %667 = sbr.rel (0) target = $region113
    $region112: #{tpu_custom_call.1} parent=1 // pred_region
      %668 = dma.done [#allocation22], 128
    $region113: #{tpu_custom_call.1} parent=1 // pred_fallthru
      _
    %669 = vsyncpa [#allocation3], 1
    %670 = vsyncpa [#allocation6], 1
    %671 = vsyncpa [#allocation9], 1
    %672 = vsyncpa [#allocation4], 1
    %673 = vsyncpa [#allocation13], 1
    %674 = vsyncpa [#allocation16], 1
    %675 = vsyncpa [#allocation19], 1
    %676 = vsyncpa [#allocation22], 1

</llo_original>
